<compile_context>
chip_gen: v5e
topology: v5e:2x2
jax: 0.10.0
libtpu: 0.0.40
codegen_flags: <defaults>
</compile_context>

<pallas_src>
import functools

import jax
import jax.numpy as jnp
from jax import lax
from jax.experimental import pallas as pl
from jax.experimental.pallas import tpu as pltpu

_LANES = 128


def _loss_kernel(logits_ref, tgt_ref,
                 focal_ref, inter_ref, psum_ref, tsum_ref,
                 *, num_classes, r_blk, hw, gamma, need_mask):
    j = pl.program_id(1)

    # Zero the resident per-batch accumulators at the first pixel tile.
    @pl.when(j == 0)
    def _():
        focal_ref[...] = jnp.zeros_like(focal_ref)
        inter_ref[...] = jnp.zeros_like(inter_ref)
        psum_ref[...] = jnp.zeros_like(psum_ref)
        tsum_ref[...] = jnp.zeros_like(tsum_ref)

    tgt = tgt_ref[...]                                        # (R, 128) int32

    if need_mask:
        row = lax.broadcasted_iota(jnp.int32, (r_blk, _LANES), 0)
        lane = lax.broadcasted_iota(jnp.int32, (r_blk, _LANES), 1)
        pix = (j * r_blk + row) * _LANES + lane
        mask = pix < hw                                       # (R, 128) bool
        maskf = mask.astype(jnp.float32)
        # Zero padded/garbage lanes BEFORE exp so they cannot inject NaN/Inf.
        x = [jnp.where(mask, logits_ref[c].astype(jnp.float32), 0.0)
             for c in range(num_classes)]
    else:
        maskf = None
        x = [logits_ref[c].astype(jnp.float32) for c in range(num_classes)]

    # Class-axis max / exp / sum as an unrolled loop of dense (R,128) VPU ops.
    m = x[0]
    for c in range(1, num_classes):
        m = jnp.maximum(m, x[c])
    e = [jnp.exp(x[c] - m) for c in range(num_classes)]
    s = e[0]
    for c in range(1, num_classes):
        s = s + e[c]

    inv_s = pl.reciprocal(s, approx=False)   # one reciprocal, not C divides
    log_s = jnp.log(s)

    onehot = [jnp.where(tgt == c, 1.0, 0.0) for c in range(num_classes)]
    if need_mask:
        tmask = [onehot[c] * maskf for c in range(num_classes)]
    else:
        tmask = onehot

    logit_true = onehot[0] * x[0]
    e_true = onehot[0] * e[0]
    for c in range(1, num_classes):
        logit_true = logit_true + onehot[c] * x[c]
        e_true = e_true + onehot[c] * e[c]

    # Cross-entropy / focal terms without the full log-softmax tensor.
    ce = log_s + m - logit_true                               # -log p_true
    pt = e_true * inv_s                                       # p_true
    omp = 1.0 - pt
    if float(gamma).is_integer():
        pow_term = lax.integer_pow(omp, int(gamma))
    else:
        pow_term = jnp.power(jnp.maximum(omp, 0.0), gamma)
    fu = pow_term * ce                                        # un-weighted focal

    # Per-class lane-dense accumulation (alpha weighting done in the glue).
    for c in range(num_classes):
        probs_c = e[c] * inv_s
        if need_mask:
            probs_c = probs_c * maskf
        focal_ref[c] += fu * tmask[c]
        inter_ref[c] += pt * tmask[c]      # == probs_c * onehot_c (masked)
        psum_ref[c] += probs_c
        tsum_ref[c] += tmask[c]


def improved_dice_focal_loss(logits_nchw, targets, alpha,
                             gamma=3.0, smooth=1e-6,
                             dice_weight=0.8, focal_weight=0.2,
                             block_rows=256):
    """Forward pass of ImprovedDiceFocalLoss. Returns a scalar loss."""
    N, C, H, W = logits_nchw.shape
    HW = H * W
    P = N * HW

    # Free reshape of contiguous NCHW; only pad the pixel axis up to a lane
    # multiple (no-op for typical H*W, and no transpose at all).
    HW_pad = pl.cdiv(HW, _LANES) * _LANES
    logits_r = logits_nchw.reshape(N, C, HW)
    tgt_r = targets.reshape(N, HW).astype(jnp.int32)
    if HW_pad != HW:
        logits_r = jnp.pad(logits_r, ((0, 0), (0, 0), (0, HW_pad - HW)))
        tgt_r = jnp.pad(tgt_r, ((0, 0), (0, HW_pad - HW)))
    R_total = HW_pad // _LANES
    logits_r = logits_r.reshape(N, C, R_total, _LANES)
    tgt_r = tgt_r.reshape(N, R_total, _LANES)

    # Pixel-row tile: big enough to amortize per-step overhead (~32K pixels),
    # small enough (~6 MiB total VMEM) to fit every chip's default scoped VMEM
    # (incl. v7x's 64 MiB physical).  Must be a multiple of 8 or the full dim.
    if R_total <= block_rows:
        r_blk = R_total
    else:
        r_blk = block_rows
    J = pl.cdiv(R_total, r_blk)
    need_mask = (HW_pad != HW) or (R_total % r_blk != 0)

    kernel = functools.partial(
        _loss_kernel, num_classes=C, r_blk=r_blk, hw=HW,
        gamma=gamma, need_mask=need_mask)

    acc_shape = jax.ShapeDtypeStruct((N, C, r_blk, _LANES), jnp.float32)
    acc_spec = pl.BlockSpec((None, C, r_blk, _LANES),
                            lambda n, j: (n, 0, 0, 0))

    focal_acc, inter_acc, psum_acc, tsum_acc = pl.pallas_call(
        kernel,
        out_shape=(acc_shape, acc_shape, acc_shape, acc_shape),
        grid_spec=pltpu.PrefetchScalarGridSpec(
            num_scalar_prefetch=0,
            grid=(N, J),
            in_specs=[
                pl.BlockSpec((None, C, r_blk, _LANES),
                             lambda n, j: (n, 0, j, 0)),      # logits tile
                pl.BlockSpec((None, r_blk, _LANES),
                             lambda n, j: (n, j, 0)),         # target tile
            ],
            out_specs=(acc_spec, acc_spec, acc_spec, acc_spec),
        ),
        compiler_params=pltpu.CompilerParams(
            dimension_semantics=("parallel", "arbitrary")),
    )(logits_r, tgt_r)

    # ---- Final tiny O(N*C*R) reductions + O(C) combination in JAX glue ----
    alpha_v = jnp.asarray(alpha, jnp.float32)
    focal_c = jnp.sum(focal_acc, axis=(0, 2, 3))              # (C,)
    focal_mean = jnp.sum(alpha_v * focal_c) / P

    inter = jnp.sum(inter_acc, axis=(0, 2, 3))                # (C,)
    union = jnp.sum(psum_acc, axis=(0, 2, 3)) + jnp.sum(tsum_acc, axis=(0, 2, 3))
    dice = (2.0 * inter + smooth) / (union + smooth)
    dice_loss_per_class = jnp.where(union > 0, 1.0 - dice, 0.0)
    dice_mean = jnp.mean(alpha_v * dice_loss_per_class)

    return focal_weight * focal_mean + dice_weight * dice_mean


def _reference_loss(logits_nchw, targets, alpha,
                    gamma=3.0, smooth=1e-6, dice_weight=0.8, focal_weight=0.2):
    """Pure-JAX reference mirroring the PyTorch module."""
    N, C, H, W = logits_nchw.shape
    alpha = jnp.asarray(alpha, jnp.float32)
    logp = jax.nn.log_softmax(logits_nchw, axis=1)
    onehot = jax.nn.one_hot(targets, C, axis=1, dtype=jnp.float32)  # (N,C,H,W)
    ce = -jnp.sum(onehot * logp, axis=1)                            # (N,H,W)
    pt = jnp.exp(-ce)
    focal = (1.0 - pt) ** gamma * ce
    alpha_t = alpha[targets]
    focal_mean = jnp.mean(alpha_t * focal)

    probs = jax.nn.softmax(logits_nchw, axis=1)
    inter = jnp.sum(probs * onehot, axis=(0, 2, 3))
    union = jnp.sum(probs, axis=(0, 2, 3)) + jnp.sum(onehot, axis=(0, 2, 3))
    dice = (2.0 * inter + smooth) / (union + smooth)
    dice_loss = jnp.where(union > 0, 1.0 - dice, 0.0)
    dice_mean = jnp.mean(alpha * dice_loss)
    return focal_weight * focal_mean + dice_weight * dice_mean


if __name__ == "__main__":
    key = jax.random.PRNGKey(0)
    k1, k2 = jax.random.split(key)

    N, C, H, W = 2, 3, 16, 16
    logits = jax.random.normal(k1, (N, C, H, W), dtype=jnp.float32)
    targets = jax.random.randint(k2, (N, H, W), 0, C, dtype=jnp.int32)

    # Default class weights from the module __init__.
    alpha = jnp.array([0.005, 25.0, 30.0], dtype=jnp.float32)

    loss_fn = jax.jit(improved_dice_focal_loss)
    loss = loss_fn(logits, targets, alpha)
    loss = jax.block_until_ready(loss)

    ref = jax.block_until_ready(_reference_loss(logits, targets, alpha))
    assert jnp.allclose(loss, ref, rtol=1e-4, atol=1e-5), (loss, ref)

    print("KERNEL_OK")
</pallas_src>

<mosaic_0001>
module attributes {stable_mosaic.version = 11 : i64} {
  func.func @_loss_kernel(%arg0: i32, %arg1: i32, %arg2: memref<1x3x2x128xf32, #tpu.memory_space<vmem>>, %arg3: memref<1x2x128xi32, #tpu.memory_space<vmem>>, %arg4: memref<1x3x2x128xf32, #tpu.memory_space<vmem>>, %arg5: memref<1x3x2x128xf32, #tpu.memory_space<vmem>>, %arg6: memref<1x3x2x128xf32, #tpu.memory_space<vmem>>, %arg7: memref<1x3x2x128xf32, #tpu.memory_space<vmem>>) attributes {dimension_semantics = [#tpu.dimension_semantics<parallel>, #tpu.dimension_semantics<arbitrary>], iteration_bounds = array<i64: 2, 1>, scalar_prefetch = 0 : i64, scratch_operands = 0 : i64, tpu.core_type = #tpu.core_type<tc>, window_params = [{transform_indices = @transform_0, window_bounds = array<i64: 1, 3, 2, 128>}, {transform_indices = @transform_1, window_bounds = array<i64: 1, 2, 128>}, {transform_indices = @transform_2, window_bounds = array<i64: 1, 3, 2, 128>}, {transform_indices = @transform_3, window_bounds = array<i64: 1, 3, 2, 128>}, {transform_indices = @transform_4, window_bounds = array<i64: 1, 3, 2, 128>}, {transform_indices = @transform_5, window_bounds = array<i64: 1, 3, 2, 128>}]} {
    %c0_i32 = arith.constant 0 : i32
    %0 = arith.cmpi eq, %arg1, %c0_i32 : i32
    %1 = arith.extui %0 : i1 to i32
    %c0_i32_0 = arith.constant 0 : i32
    %2 = arith.cmpi ne, %1, %c0_i32_0 : i32
    scf.if %2 {
      %cst_116 = arith.constant 0.000000e+00 : f32
      %137 = vector.broadcast %cst_116 : f32 to vector<3x2x128xf32>
      %c0_117 = arith.constant 0 : index
      %c0_118 = arith.constant 0 : index
      %c0_119 = arith.constant 0 : index
      %c0_120 = arith.constant 0 : index
      %138 = vector.load %arg4[%c0_117, %c0_118, %c0_119, %c0_120] : memref<1x3x2x128xf32, #tpu.memory_space<vmem>>, vector<1x3x2x128xf32>
      %139 = vector.shape_cast %138 : vector<1x3x2x128xf32> to vector<3x2x128xf32>
      %140 = vector.shape_cast %137 : vector<3x2x128xf32> to vector<1x3x2x128xf32>
      tpu.vector_store %arg4[%c0_117, %c0_118, %c0_119, %c0_120], %140 {strides = array<i32>} : memref<1x3x2x128xf32, #tpu.memory_space<vmem>>, vector<1x3x2x128xf32>,
      %cst_121 = arith.constant 0.000000e+00 : f32
      %141 = vector.broadcast %cst_121 : f32 to vector<3x2x128xf32>
      %c0_122 = arith.constant 0 : index
      %c0_123 = arith.constant 0 : index
      %c0_124 = arith.constant 0 : index
      %c0_125 = arith.constant 0 : index
      %142 = vector.load %arg5[%c0_122, %c0_123, %c0_124, %c0_125] : memref<1x3x2x128xf32, #tpu.memory_space<vmem>>, vector<1x3x2x128xf32>
      %143 = vector.shape_cast %142 : vector<1x3x2x128xf32> to vector<3x2x128xf32>
      %144 = vector.shape_cast %141 : vector<3x2x128xf32> to vector<1x3x2x128xf32>
      tpu.vector_store %arg5[%c0_122, %c0_123, %c0_124, %c0_125], %144 {strides = array<i32>} : memref<1x3x2x128xf32, #tpu.memory_space<vmem>>, vector<1x3x2x128xf32>,
      %cst_126 = arith.constant 0.000000e+00 : f32
      %145 = vector.broadcast %cst_126 : f32 to vector<3x2x128xf32>
      %c0_127 = arith.constant 0 : index
      %c0_128 = arith.constant 0 : index
      %c0_129 = arith.constant 0 : index
      %c0_130 = arith.constant 0 : index
      %146 = vector.load %arg6[%c0_127, %c0_128, %c0_129, %c0_130] : memref<1x3x2x128xf32, #tpu.memory_space<vmem>>, vector<1x3x2x128xf32>
      %147 = vector.shape_cast %146 : vector<1x3x2x128xf32> to vector<3x2x128xf32>
      %148 = vector.shape_cast %145 : vector<3x2x128xf32> to vector<1x3x2x128xf32>
      tpu.vector_store %arg6[%c0_127, %c0_128, %c0_129, %c0_130], %148 {strides = array<i32>} : memref<1x3x2x128xf32, #tpu.memory_space<vmem>>, vector<1x3x2x128xf32>,
      %cst_131 = arith.constant 0.000000e+00 : f32
      %149 = vector.broadcast %cst_131 : f32 to vector<3x2x128xf32>
      %c0_132 = arith.constant 0 : index
      %c0_133 = arith.constant 0 : index
      %c0_134 = arith.constant 0 : index
      %c0_135 = arith.constant 0 : index
      %150 = vector.load %arg7[%c0_132, %c0_133, %c0_134, %c0_135] : memref<1x3x2x128xf32, #tpu.memory_space<vmem>>, vector<1x3x2x128xf32>
      %151 = vector.shape_cast %150 : vector<1x3x2x128xf32> to vector<3x2x128xf32>
      %152 = vector.shape_cast %149 : vector<3x2x128xf32> to vector<1x3x2x128xf32>
      tpu.vector_store %arg7[%c0_132, %c0_133, %c0_134, %c0_135], %152 {strides = array<i32>} : memref<1x3x2x128xf32, #tpu.memory_space<vmem>>, vector<1x3x2x128xf32>,
    } else {
    }
    %c0 = arith.constant 0 : index
    %c0_1 = arith.constant 0 : index
    %c0_2 = arith.constant 0 : index
    %3 = vector.load %arg3[%c0, %c0_1, %c0_2] : memref<1x2x128xi32, #tpu.memory_space<vmem>>, vector<1x2x128xi32>
    %4 = vector.shape_cast %3 : vector<1x2x128xi32> to vector<2x128xi32>
    %c0_3 = arith.constant 0 : index
    %c0_4 = arith.constant 0 : index
    %c0_5 = arith.constant 0 : index
    %c0_6 = arith.constant 0 : index
    %5 = vector.load %arg2[%c0_3, %c0_4, %c0_5, %c0_6] : memref<1x3x2x128xf32, #tpu.memory_space<vmem>>, vector<1x1x2x128xf32>
    %6 = vector.shape_cast %5 : vector<1x1x2x128xf32> to vector<2x128xf32>
    %c0_7 = arith.constant 0 : index
    %c1 = arith.constant 1 : index
    %c0_8 = arith.constant 0 : index
    %c0_9 = arith.constant 0 : index
    %7 = vector.load %arg2[%c0_7, %c1, %c0_8, %c0_9] : memref<1x3x2x128xf32, #tpu.memory_space<vmem>>, vector<1x1x2x128xf32>
    %8 = vector.shape_cast %7 : vector<1x1x2x128xf32> to vector<2x128xf32>
    %c0_10 = arith.constant 0 : index
    %c2 = arith.constant 2 : index
    %c0_11 = arith.constant 0 : index
    %c0_12 = arith.constant 0 : index
    %9 = vector.load %arg2[%c0_10, %c2, %c0_11, %c0_12] : memref<1x3x2x128xf32, #tpu.memory_space<vmem>>, vector<1x1x2x128xf32>
    %10 = vector.shape_cast %9 : vector<1x1x2x128xf32> to vector<2x128xf32>
    %11 = arith.maximumf %6, %8 : vector<2x128xf32>
    %12 = arith.maximumf %11, %10 : vector<2x128xf32>
    %13 = arith.subf %6, %12 : vector<2x128xf32>
    %14 = math.exp %13 : vector<2x128xf32>
    %15 = arith.subf %8, %12 : vector<2x128xf32>
    %16 = math.exp %15 : vector<2x128xf32>
    %17 = arith.subf %10, %12 : vector<2x128xf32>
    %18 = math.exp %17 : vector<2x128xf32>
    %19 = arith.addf %14, %16 : vector<2x128xf32>
    %20 = arith.addf %19, %18 : vector<2x128xf32>
    %21 = tpu.reciprocal %20 : vector<2x128xf32> -> vector<2x128xf32>
    %22 = math.log %20 : vector<2x128xf32>
    %c0_i32_13 = arith.constant 0 : i32
    %23 = vector.broadcast %c0_i32_13 : i32 to vector<2x128xi32>
    %24 = arith.cmpi eq, %4, %23 : vector<2x128xi32>
    %cst = arith.constant 1.000000e+00 : f32
    %cst_14 = arith.constant 0.000000e+00 : f32
    %25 = vector.broadcast %cst : f32 to vector<2x128xf32>
    %26 = vector.broadcast %cst_14 : f32 to vector<2x128xf32>
    %27 = arith.select %24, %25, %26 : vector<2x128xi1>, vector<2x128xf32>
    %c1_i32 = arith.constant 1 : i32
    %28 = vector.broadcast %c1_i32 : i32 to vector<2x128xi32>
    %29 = arith.cmpi eq, %4, %28 : vector<2x128xi32>
    %cst_15 = arith.constant 1.000000e+00 : f32
    %cst_16 = arith.constant 0.000000e+00 : f32
    %30 = vector.broadcast %cst_15 : f32 to vector<2x128xf32>
    %31 = vector.broadcast %cst_16 : f32 to vector<2x128xf32>
    %32 = arith.select %29, %30, %31 : vector<2x128xi1>, vector<2x128xf32>
    %c2_i32 = arith.constant 2 : i32
    %33 = vector.broadcast %c2_i32 : i32 to vector<2x128xi32>
    %34 = arith.cmpi eq, %4, %33 : vector<2x128xi32>
    %cst_17 = arith.constant 1.000000e+00 : f32
    %cst_18 = arith.constant 0.000000e+00 : f32
    %35 = vector.broadcast %cst_17 : f32 to vector<2x128xf32>
    %36 = vector.broadcast %cst_18 : f32 to vector<2x128xf32>
    %37 = arith.select %34, %35, %36 : vector<2x128xi1>, vector<2x128xf32>
    %38 = arith.mulf %27, %6 : vector<2x128xf32>
    %39 = arith.mulf %27, %14 : vector<2x128xf32>
    %40 = arith.mulf %32, %8 : vector<2x128xf32>
    %41 = arith.addf %38, %40 : vector<2x128xf32>
    %42 = arith.mulf %32, %16 : vector<2x128xf32>
    %43 = arith.addf %39, %42 : vector<2x128xf32>
    %44 = arith.mulf %37, %10 : vector<2x128xf32>
    %45 = arith.addf %41, %44 : vector<2x128xf32>
    %46 = arith.mulf %37, %18 : vector<2x128xf32>
    %47 = arith.addf %43, %46 : vector<2x128xf32>
    %48 = arith.addf %22, %12 : vector<2x128xf32>
    %49 = arith.subf %48, %45 : vector<2x128xf32>
    %50 = arith.mulf %47, %21 : vector<2x128xf32>
    %cst_19 = arith.constant 1.000000e+00 : f32
    %51 = vector.broadcast %cst_19 : f32 to vector<2x128xf32>
    %52 = arith.subf %51, %50 : vector<2x128xf32>
    %53 = arith.mulf %52, %52 : vector<2x128xf32>
    %54 = arith.mulf %52, %53 : vector<2x128xf32>
    %55 = arith.mulf %54, %49 : vector<2x128xf32>
    %56 = arith.mulf %14, %21 : vector<2x128xf32>
    %c0_20 = arith.constant 0 : index
    %c0_21 = arith.constant 0 : index
    %c0_22 = arith.constant 0 : index
    %c0_23 = arith.constant 0 : index
    %57 = vector.load %arg4[%c0_20, %c0_21, %c0_22, %c0_23] : memref<1x3x2x128xf32, #tpu.memory_space<vmem>>, vector<1x1x2x128xf32>
    %58 = vector.shape_cast %57 : vector<1x1x2x128xf32> to vector<2x128xf32>
    %59 = arith.mulf %55, %27 : vector<2x128xf32>
    %60 = arith.addf %58, %59 : vector<2x128xf32>
    %c0_24 = arith.constant 0 : index
    %c0_25 = arith.constant 0 : index
    %c0_26 = arith.constant 0 : index
    %c0_27 = arith.constant 0 : index
    %61 = vector.load %arg4[%c0_24, %c0_25, %c0_26, %c0_27] : memref<1x3x2x128xf32, #tpu.memory_space<vmem>>, vector<1x1x2x128xf32>
    %62 = vector.shape_cast %61 : vector<1x1x2x128xf32> to vector<2x128xf32>
    %63 = vector.shape_cast %60 : vector<2x128xf32> to vector<1x1x2x128xf32>
    tpu.vector_store %arg4[%c0_24, %c0_25, %c0_26, %c0_27], %63 {strides = array<i32>} : memref<1x3x2x128xf32, #tpu.memory_space<vmem>>, vector<1x1x2x128xf32>,
    %c0_28 = arith.constant 0 : index
    %c0_29 = arith.constant 0 : index
    %c0_30 = arith.constant 0 : index
    %c0_31 = arith.constant 0 : index
    %64 = vector.load %arg5[%c0_28, %c0_29, %c0_30, %c0_31] : memref<1x3x2x128xf32, #tpu.memory_space<vmem>>, vector<1x1x2x128xf32>
    %65 = vector.shape_cast %64 : vector<1x1x2x128xf32> to vector<2x128xf32>
    %66 = arith.mulf %50, %27 : vector<2x128xf32>
    %67 = arith.addf %65, %66 : vector<2x128xf32>
    %c0_32 = arith.constant 0 : index
    %c0_33 = arith.constant 0 : index
    %c0_34 = arith.constant 0 : index
    %c0_35 = arith.constant 0 : index
    %68 = vector.load %arg5[%c0_32, %c0_33, %c0_34, %c0_35] : memref<1x3x2x128xf32, #tpu.memory_space<vmem>>, vector<1x1x2x128xf32>
    %69 = vector.shape_cast %68 : vector<1x1x2x128xf32> to vector<2x128xf32>
    %70 = vector.shape_cast %67 : vector<2x128xf32> to vector<1x1x2x128xf32>
    tpu.vector_store %arg5[%c0_32, %c0_33, %c0_34, %c0_35], %70 {strides = array<i32>} : memref<1x3x2x128xf32, #tpu.memory_space<vmem>>, vector<1x1x2x128xf32>,
    %c0_36 = arith.constant 0 : index
    %c0_37 = arith.constant 0 : index
    %c0_38 = arith.constant 0 : index
    %c0_39 = arith.constant 0 : index
    %71 = vector.load %arg6[%c0_36, %c0_37, %c0_38, %c0_39] : memref<1x3x2x128xf32, #tpu.memory_space<vmem>>, vector<1x1x2x128xf32>
    %72 = vector.shape_cast %71 : vector<1x1x2x128xf32> to vector<2x128xf32>
    %73 = arith.addf %72, %56 : vector<2x128xf32>
    %c0_40 = arith.constant 0 : index
    %c0_41 = arith.constant 0 : index
    %c0_42 = arith.constant 0 : index
    %c0_43 = arith.constant 0 : index
    %74 = vector.load %arg6[%c0_40, %c0_41, %c0_42, %c0_43] : memref<1x3x2x128xf32, #tpu.memory_space<vmem>>, vector<1x1x2x128xf32>
    %75 = vector.shape_cast %74 : vector<1x1x2x128xf32> to vector<2x128xf32>
    %76 = vector.shape_cast %73 : vector<2x128xf32> to vector<1x1x2x128xf32>
    tpu.vector_store %arg6[%c0_40, %c0_41, %c0_42, %c0_43], %76 {strides = array<i32>} : memref<1x3x2x128xf32, #tpu.memory_space<vmem>>, vector<1x1x2x128xf32>,
    %c0_44 = arith.constant 0 : index
    %c0_45 = arith.constant 0 : index
    %c0_46 = arith.constant 0 : index
    %c0_47 = arith.constant 0 : index
    %77 = vector.load %arg7[%c0_44, %c0_45, %c0_46, %c0_47] : memref<1x3x2x128xf32, #tpu.memory_space<vmem>>, vector<1x1x2x128xf32>
    %78 = vector.shape_cast %77 : vector<1x1x2x128xf32> to vector<2x128xf32>
    %79 = arith.addf %78, %27 : vector<2x128xf32>
    %c0_48 = arith.constant 0 : index
    %c0_49 = arith.constant 0 : index
    %c0_50 = arith.constant 0 : index
    %c0_51 = arith.constant 0 : index
    %80 = vector.load %arg7[%c0_48, %c0_49, %c0_50, %c0_51] : memref<1x3x2x128xf32, #tpu.memory_space<vmem>>, vector<1x1x2x128xf32>
    %81 = vector.shape_cast %80 : vector<1x1x2x128xf32> to vector<2x128xf32>
    %82 = vector.shape_cast %79 : vector<2x128xf32> to vector<1x1x2x128xf32>
    tpu.vector_store %arg7[%c0_48, %c0_49, %c0_50, %c0_51], %82 {strides = array<i32>} : memref<1x3x2x128xf32, #tpu.memory_space<vmem>>, vector<1x1x2x128xf32>,
    %83 = arith.mulf %16, %21 : vector<2x128xf32>
    %c0_52 = arith.constant 0 : index
    %c1_53 = arith.constant 1 : index
    %c0_54 = arith.constant 0 : index
    %c0_55 = arith.constant 0 : index
    %84 = vector.load %arg4[%c0_52, %c1_53, %c0_54, %c0_55] : memref<1x3x2x128xf32, #tpu.memory_space<vmem>>, vector<1x1x2x128xf32>
    %85 = vector.shape_cast %84 : vector<1x1x2x128xf32> to vector<2x128xf32>
    %86 = arith.mulf %55, %32 : vector<2x128xf32>
    %87 = arith.addf %85, %86 : vector<2x128xf32>
    %c0_56 = arith.constant 0 : index
    %c1_57 = arith.constant 1 : index
    %c0_58 = arith.constant 0 : index
    %c0_59 = arith.constant 0 : index
    %88 = vector.load %arg4[%c0_56, %c1_57, %c0_58, %c0_59] : memref<1x3x2x128xf32, #tpu.memory_space<vmem>>, vector<1x1x2x128xf32>
    %89 = vector.shape_cast %88 : vector<1x1x2x128xf32> to vector<2x128xf32>
    %90 = vector.shape_cast %87 : vector<2x128xf32> to vector<1x1x2x128xf32>
    tpu.vector_store %arg4[%c0_56, %c1_57, %c0_58, %c0_59], %90 {strides = array<i32>} : memref<1x3x2x128xf32, #tpu.memory_space<vmem>>, vector<1x1x2x128xf32>,
    %c0_60 = arith.constant 0 : index
    %c1_61 = arith.constant 1 : index
    %c0_62 = arith.constant 0 : index
    %c0_63 = arith.constant 0 : index
    %91 = vector.load %arg5[%c0_60, %c1_61, %c0_62, %c0_63] : memref<1x3x2x128xf32, #tpu.memory_space<vmem>>, vector<1x1x2x128xf32>
    %92 = vector.shape_cast %91 : vector<1x1x2x128xf32> to vector<2x128xf32>
    %93 = arith.mulf %50, %32 : vector<2x128xf32>
    %94 = arith.addf %92, %93 : vector<2x128xf32>
    %c0_64 = arith.constant 0 : index
    %c1_65 = arith.constant 1 : index
    %c0_66 = arith.constant 0 : index
    %c0_67 = arith.constant 0 : index
    %95 = vector.load %arg5[%c0_64, %c1_65, %c0_66, %c0_67] : memref<1x3x2x128xf32, #tpu.memory_space<vmem>>, vector<1x1x2x128xf32>
    %96 = vector.shape_cast %95 : vector<1x1x2x128xf32> to vector<2x128xf32>
    %97 = vector.shape_cast %94 : vector<2x128xf32> to vector<1x1x2x128xf32>
    tpu.vector_store %arg5[%c0_64, %c1_65, %c0_66, %c0_67], %97 {strides = array<i32>} : memref<1x3x2x128xf32, #tpu.memory_space<vmem>>, vector<1x1x2x128xf32>,
    %c0_68 = arith.constant 0 : index
    %c1_69 = arith.constant 1 : index
    %c0_70 = arith.constant 0 : index
    %c0_71 = arith.constant 0 : index
    %98 = vector.load %arg6[%c0_68, %c1_69, %c0_70, %c0_71] : memref<1x3x2x128xf32, #tpu.memory_space<vmem>>, vector<1x1x2x128xf32>
    %99 = vector.shape_cast %98 : vector<1x1x2x128xf32> to vector<2x128xf32>
    %100 = arith.addf %99, %83 : vector<2x128xf32>
    %c0_72 = arith.constant 0 : index
    %c1_73 = arith.constant 1 : index
    %c0_74 = arith.constant 0 : index
    %c0_75 = arith.constant 0 : index
    %101 = vector.load %arg6[%c0_72, %c1_73, %c0_74, %c0_75] : memref<1x3x2x128xf32, #tpu.memory_space<vmem>>, vector<1x1x2x128xf32>
    %102 = vector.shape_cast %101 : vector<1x1x2x128xf32> to vector<2x128xf32>
    %103 = vector.shape_cast %100 : vector<2x128xf32> to vector<1x1x2x128xf32>
    tpu.vector_store %arg6[%c0_72, %c1_73, %c0_74, %c0_75], %103 {strides = array<i32>} : memref<1x3x2x128xf32, #tpu.memory_space<vmem>>, vector<1x1x2x128xf32>,
    %c0_76 = arith.constant 0 : index
    %c1_77 = arith.constant 1 : index
    %c0_78 = arith.constant 0 : index
    %c0_79 = arith.constant 0 : index
    %104 = vector.load %arg7[%c0_76, %c1_77, %c0_78, %c0_79] : memref<1x3x2x128xf32, #tpu.memory_space<vmem>>, vector<1x1x2x128xf32>
    %105 = vector.shape_cast %104 : vector<1x1x2x128xf32> to vector<2x128xf32>
    %106 = arith.addf %105, %32 : vector<2x128xf32>
    %c0_80 = arith.constant 0 : index
    %c1_81 = arith.constant 1 : index
    %c0_82 = arith.constant 0 : index
    %c0_83 = arith.constant 0 : index
    %107 = vector.load %arg7[%c0_80, %c1_81, %c0_82, %c0_83] : memref<1x3x2x128xf32, #tpu.memory_space<vmem>>, vector<1x1x2x128xf32>
    %108 = vector.shape_cast %107 : vector<1x1x2x128xf32> to vector<2x128xf32>
    %109 = vector.shape_cast %106 : vector<2x128xf32> to vector<1x1x2x128xf32>
    tpu.vector_store %arg7[%c0_80, %c1_81, %c0_82, %c0_83], %109 {strides = array<i32>} : memref<1x3x2x128xf32, #tpu.memory_space<vmem>>, vector<1x1x2x128xf32>,
    %110 = arith.mulf %18, %21 : vector<2x128xf32>
    %c0_84 = arith.constant 0 : index
    %c2_85 = arith.constant 2 : index
    %c0_86 = arith.constant 0 : index
    %c0_87 = arith.constant 0 : index
    %111 = vector.load %arg4[%c0_84, %c2_85, %c0_86, %c0_87] : memref<1x3x2x128xf32, #tpu.memory_space<vmem>>, vector<1x1x2x128xf32>
    %112 = vector.shape_cast %111 : vector<1x1x2x128xf32> to vector<2x128xf32>
    %113 = arith.mulf %55, %37 : vector<2x128xf32>
    %114 = arith.addf %112, %113 : vector<2x128xf32>
    %c0_88 = arith.constant 0 : index
    %c2_89 = arith.constant 2 : index
    %c0_90 = arith.constant 0 : index
    %c0_91 = arith.constant 0 : index
    %115 = vector.load %arg4[%c0_88, %c2_89, %c0_90, %c0_91] : memref<1x3x2x128xf32, #tpu.memory_space<vmem>>, vector<1x1x2x128xf32>
    %116 = vector.shape_cast %115 : vector<1x1x2x128xf32> to vector<2x128xf32>
    %117 = vector.shape_cast %114 : vector<2x128xf32> to vector<1x1x2x128xf32>
    tpu.vector_store %arg4[%c0_88, %c2_89, %c0_90, %c0_91], %117 {strides = array<i32>} : memref<1x3x2x128xf32, #tpu.memory_space<vmem>>, vector<1x1x2x128xf32>,
    %c0_92 = arith.constant 0 : index
    %c2_93 = arith.constant 2 : index
    %c0_94 = arith.constant 0 : index
    %c0_95 = arith.constant 0 : index
    %118 = vector.load %arg5[%c0_92, %c2_93, %c0_94, %c0_95] : memref<1x3x2x128xf32, #tpu.memory_space<vmem>>, vector<1x1x2x128xf32>
    %119 = vector.shape_cast %118 : vector<1x1x2x128xf32> to vector<2x128xf32>
    %120 = arith.mulf %50, %37 : vector<2x128xf32>
    %121 = arith.addf %119, %120 : vector<2x128xf32>
    %c0_96 = arith.constant 0 : index
    %c2_97 = arith.constant 2 : index
    %c0_98 = arith.constant 0 : index
    %c0_99 = arith.constant 0 : index
    %122 = vector.load %arg5[%c0_96, %c2_97, %c0_98, %c0_99] : memref<1x3x2x128xf32, #tpu.memory_space<vmem>>, vector<1x1x2x128xf32>
    %123 = vector.shape_cast %122 : vector<1x1x2x128xf32> to vector<2x128xf32>
    %124 = vector.shape_cast %121 : vector<2x128xf32> to vector<1x1x2x128xf32>
    tpu.vector_store %arg5[%c0_96, %c2_97, %c0_98, %c0_99], %124 {strides = array<i32>} : memref<1x3x2x128xf32, #tpu.memory_space<vmem>>, vector<1x1x2x128xf32>,
    %c0_100 = arith.constant 0 : index
    %c2_101 = arith.constant 2 : index
    %c0_102 = arith.constant 0 : index
    %c0_103 = arith.constant 0 : index
    %125 = vector.load %arg6[%c0_100, %c2_101, %c0_102, %c0_103] : memref<1x3x2x128xf32, #tpu.memory_space<vmem>>, vector<1x1x2x128xf32>
    %126 = vector.shape_cast %125 : vector<1x1x2x128xf32> to vector<2x128xf32>
    %127 = arith.addf %126, %110 : vector<2x128xf32>
    %c0_104 = arith.constant 0 : index
    %c2_105 = arith.constant 2 : index
    %c0_106 = arith.constant 0 : index
    %c0_107 = arith.constant 0 : index
    %128 = vector.load %arg6[%c0_104, %c2_105, %c0_106, %c0_107] : memref<1x3x2x128xf32, #tpu.memory_space<vmem>>, vector<1x1x2x128xf32>
    %129 = vector.shape_cast %128 : vector<1x1x2x128xf32> to vector<2x128xf32>
    %130 = vector.shape_cast %127 : vector<2x128xf32> to vector<1x1x2x128xf32>
    tpu.vector_store %arg6[%c0_104, %c2_105, %c0_106, %c0_107], %130 {strides = array<i32>} : memref<1x3x2x128xf32, #tpu.memory_space<vmem>>, vector<1x1x2x128xf32>,
    %c0_108 = arith.constant 0 : index
    %c2_109 = arith.constant 2 : index
    %c0_110 = arith.constant 0 : index
    %c0_111 = arith.constant 0 : index
    %131 = vector.load %arg7[%c0_108, %c2_109, %c0_110, %c0_111] : memref<1x3x2x128xf32, #tpu.memory_space<vmem>>, vector<1x1x2x128xf32>
    %132 = vector.shape_cast %131 : vector<1x1x2x128xf32> to vector<2x128xf32>
    %133 = arith.addf %132, %37 : vector<2x128xf32>
    %c0_112 = arith.constant 0 : index
    %c2_113 = arith.constant 2 : index
    %c0_114 = arith.constant 0 : index
    %c0_115 = arith.constant 0 : index
    %134 = vector.load %arg7[%c0_112, %c2_113, %c0_114, %c0_115] : memref<1x3x2x128xf32, #tpu.memory_space<vmem>>, vector<1x1x2x128xf32>
    %135 = vector.shape_cast %134 : vector<1x1x2x128xf32> to vector<2x128xf32>
    %136 = vector.shape_cast %133 : vector<2x128xf32> to vector<1x1x2x128xf32>
    tpu.vector_store %arg7[%c0_112, %c2_113, %c0_114, %c0_115], %136 {strides = array<i32>} : memref<1x3x2x128xf32, #tpu.memory_space<vmem>>, vector<1x1x2x128xf32>,
    return
  }
  func.func @transform_0(%arg0: i32, %arg1: i32) -> (i32, i32, i32, i32) {
    %c0_i32 = arith.constant 0 : i32
    %c0_i32_0 = arith.constant 0 : i32
    %c0_i32_1 = arith.constant 0 : i32
    return %arg0, %c0_i32, %arg1, %c0_i32_0 : i32, i32, i32, i32
  }
  func.func @transform_1(%arg0: i32, %arg1: i32) -> (i32, i32, i32) {
    %c0_i32 = arith.constant 0 : i32
    %c0_i32_0 = arith.constant 0 : i32
    return %arg0, %arg1, %c0_i32 : i32, i32, i32
  }
  func.func @transform_2(%arg0: i32, %arg1: i32) -> (i32, i32, i32, i32) {
    %c0_i32 = arith.constant 0 : i32
    %c0_i32_0 = arith.constant 0 : i32
    %c0_i32_1 = arith.constant 0 : i32
    %c0_i32_2 = arith.constant 0 : i32
    return %arg0, %c0_i32, %c0_i32_0, %c0_i32_1 : i32, i32, i32, i32
  }
  func.func @transform_3(%arg0: i32, %arg1: i32) -> (i32, i32, i32, i32) {
    %c0_i32 = arith.constant 0 : i32
    %c0_i32_0 = arith.constant 0 : i32
    %c0_i32_1 = arith.constant 0 : i32
    %c0_i32_2 = arith.constant 0 : i32
    return %arg0, %c0_i32, %c0_i32_0, %c0_i32_1 : i32, i32, i32, i32
  }
  func.func @transform_4(%arg0: i32, %arg1: i32) -> (i32, i32, i32, i32) {
    %c0_i32 = arith.constant 0 : i32
    %c0_i32_0 = arith.constant 0 : i32
    %c0_i32_1 = arith.constant 0 : i32
    %c0_i32_2 = arith.constant 0 : i32
    return %arg0, %c0_i32, %c0_i32_0, %c0_i32_1 : i32, i32, i32, i32
  }
  func.func @transform_5(%arg0: i32, %arg1: i32) -> (i32, i32, i32, i32) {
    %c0_i32 = arith.constant 0 : i32
    %c0_i32_0 = arith.constant 0 : i32
    %c0_i32_1 = arith.constant 0 : i32
    %c0_i32_2 = arith.constant 0 : i32
    return %arg0, %c0_i32, %c0_i32_0, %c0_i32_1 : i32, i32, i32, i32
  }
}

</mosaic_0001>

<llo_original>
// kernel: improved_dice_focal_loss.1
$region0: #{improved_dice_focal_loss.1}
  #allocation0 [shape = 'u32[]', space=smem, size = 0x4, offset = 0x4, fixed_abs, tag = 'smem constant byte address 0x4 - core index']
  #allocation1 [shape = 'u32[72,128]{1,0:T(1,128)}', space=vmem, size = 0x9000, scoped, tag = 'internal scratch']
  %s0 = inlined_call_operand.vmem [shape: f32[2,3,2,128], index: 0, kind: input, shape index: {}]
  %s1 = inlined_call_operand.vmem [shape: s32[2,2,128], index: 1, kind: input, shape index: {}]
  %s2 = inlined_call_operand.vmem [shape: f32[2,3,2,128], index: 2, kind: output, shape index: {0}]
  %s3 = inlined_call_operand.vmem [shape: f32[2,3,2,128], index: 3, kind: output, shape index: {1}]
  %s4 = inlined_call_operand.vmem [shape: f32[2,3,2,128], index: 4, kind: output, shape index: {2}]
  %s5 = inlined_call_operand.vmem [shape: f32[2,3,2,128], index: 5, kind: output, shape index: {3}]
  %6 = xla_tuple %s2, %s3, %s4, %s5
  %s7 = sld [smem:[#allocation0]]
  $region69: #{improved_dice_focal_loss.1} parent=0
    _
  %s9 = ssub.s32 1, %s7
  %s10 = scalar_select 0, %s9, %s7
  loop: start=0, step=1, limit=4
  $region2: #{improved_dice_focal_loss.1} parent=0 // loop_pre_header
    _
  $region3: #{improved_dice_focal_loss.1} parent=0 // loop_header
    %s12 = sphi 0, %s16
    %p13 = scmp.ge.s32.totalorder %s12, 4
    %s19 = sphi 0, %s31
    %s20 = sphi 0, %s27
    %s21 = sphi 0, %s19
    %s22 = sphi 0, %s20
    %s23 = sphi 0, %s21
    %s24 = sphi 0, %s22
    %s36 = sphi 0, %s38
    %s39 = sphi 0, %s36
    %s40 = sphi 0, %s39
    %s56 = sphi 0, %s40
    %s64 = sphi 0, %s66
    %s67 = sphi 0, %s64
    %s68 = sphi 0, %s67
    %s84 = sphi 0, %s68
    %s90 = sphi 0, %s92
    %s93 = sphi 0, %s90
    %s94 = sphi 0, %s93
    %s110 = sphi 0, %s94
    %s116 = sphi 0, %s118
    %s119 = sphi 0, %s116
    %s120 = sphi 0, %s119
    %s136 = sphi 0, %s120
    %s142 = sphi 0, %s144
    %s145 = sphi 0, %s142
    %s146 = sphi 0, %s145
    %s162 = sphi 0, %s146
    %s168 = sphi 0, %s170
    %s171 = sphi 0, %s168
    %s172 = sphi 0, %s171
    %s188 = sphi 0, %s172
  $region4: #{improved_dice_focal_loss.1} parent=0 // loop_header_branch
    %15 = sbr.rel (%p13) target = $region8
  $region5: #{improved_dice_focal_loss.1} parent=0 // loop_body
    %s17 = ssub.s32 %s12, 1
    %s18 = ssub.s32 %s12, 2
    %s25 = sadd.s32 1, %s20
    %p26 = scmp.ge.s32.totalorder %s25, 1
    %s27 = scalar_select %p26, 0, %s25
    %s28 = sadd.s32 1, %s19
    %s29 = scalar_select %p26, %s28, %s19
    %p30 = scmp.ge.s32.totalorder %s29, 2
    %s31 = scalar_select %p30, 0, %s29
    %s32 = ssub.s32 %s19, %s31
    %s33 = ssub.s32 %s20, %s27
    %s34 = sor.u32 %s32, %s33
    %p35 = scmp.eq.s32.totalorder %s34, 0
    %s37 = sadd.s32 %s36, 1
    %s38 = scalar_select %p35, %s36, %s37
    %p41 = pneg %p35
    %p42 = scmp.eq.s32.totalorder %s12, 1
    %p43 = por %p41, %p42
    %p44 = scmp.ne.s32.totalorder %s36, %s39
    %p45 = scmp.eq.s32.totalorder %s12, 0
    %p46 = por %p44, %p45
    %p47 = scmp.ne.s32.totalorder %s36, %s39
    %p48 = scmp.eq.s32.totalorder %s17, 1
    %p49 = por %p47, %p48
    %p50 = scmp.ne.s32.totalorder %s39, %s40
    %p51 = scmp.eq.s32.totalorder %s17, 0
    %p52 = por %p50, %p51
    %p53 = scmp.ne.s32.totalorder %s39, %s40
    %p54 = scmp.eq.s32.totalorder %s18, 1
    %p55 = por %p53, %p54
    %p57 = scmp.ne.s32.totalorder %s40, %s56
    %p58 = scmp.eq.s32.totalorder %s18, 0
    %p59 = por %p57, %p58
    %s60 = ssub.s32 %s19, %s31
    %s61 = ssub.s32 %s20, %s27
    %s62 = sor.u32 %s60, %s61
    %p63 = scmp.eq.s32.totalorder %s62, 0
    %s65 = sadd.s32 %s64, 1
    %s66 = scalar_select %p63, %s64, %s65
    %p69 = pneg %p63
    %p70 = scmp.eq.s32.totalorder %s12, 1
    %p71 = por %p69, %p70
    %p72 = scmp.ne.s32.totalorder %s64, %s67
    %p73 = scmp.eq.s32.totalorder %s12, 0
    %p74 = por %p72, %p73
    %p75 = scmp.ne.s32.totalorder %s64, %s67
    %p76 = scmp.eq.s32.totalorder %s17, 1
    %p77 = por %p75, %p76
    %p78 = scmp.ne.s32.totalorder %s67, %s68
    %p79 = scmp.eq.s32.totalorder %s17, 0
    %p80 = por %p78, %p79
    %p81 = scmp.ne.s32.totalorder %s67, %s68
    %p82 = scmp.eq.s32.totalorder %s18, 1
    %p83 = por %p81, %p82
    %p85 = scmp.ne.s32.totalorder %s68, %s84
    %p86 = scmp.eq.s32.totalorder %s18, 0
    %p87 = por %p85, %p86
    %s88 = ssub.s32 %s19, %s31
    %p89 = scmp.eq.s32.totalorder %s88, 0
    %s91 = sadd.s32 %s90, 1
    %s92 = scalar_select %p89, %s90, %s91
    %p95 = pneg %p89
    %p96 = scmp.eq.s32.totalorder %s12, 1
    %p97 = por %p95, %p96
    %p98 = scmp.ne.s32.totalorder %s90, %s93
    %p99 = scmp.eq.s32.totalorder %s12, 0
    %p100 = por %p98, %p99
    %p101 = scmp.ne.s32.totalorder %s90, %s93
    %p102 = scmp.eq.s32.totalorder %s17, 1
    %p103 = por %p101, %p102
    %p104 = scmp.ne.s32.totalorder %s93, %s94
    %p105 = scmp.eq.s32.totalorder %s17, 0
    %p106 = por %p104, %p105
    %p107 = scmp.ne.s32.totalorder %s93, %s94
    %p108 = scmp.eq.s32.totalorder %s18, 1
    %p109 = por %p107, %p108
    %p111 = scmp.ne.s32.totalorder %s94, %s110
    %p112 = scmp.eq.s32.totalorder %s18, 0
    %p113 = por %p111, %p112
    %s114 = ssub.s32 %s19, %s31
    %p115 = scmp.eq.s32.totalorder %s114, 0
    %s117 = sadd.s32 %s116, 1
    %s118 = scalar_select %p115, %s116, %s117
    %p121 = pneg %p115
    %p122 = scmp.eq.s32.totalorder %s12, 1
    %p123 = por %p121, %p122
    %p124 = scmp.ne.s32.totalorder %s116, %s119
    %p125 = scmp.eq.s32.totalorder %s12, 0
    %p126 = por %p124, %p125
    %p127 = scmp.ne.s32.totalorder %s116, %s119
    %p128 = scmp.eq.s32.totalorder %s17, 1
    %p129 = por %p127, %p128
    %p130 = scmp.ne.s32.totalorder %s119, %s120
    %p131 = scmp.eq.s32.totalorder %s17, 0
    %p132 = por %p130, %p131
    %p133 = scmp.ne.s32.totalorder %s119, %s120
    %p134 = scmp.eq.s32.totalorder %s18, 1
    %p135 = por %p133, %p134
    %p137 = scmp.ne.s32.totalorder %s120, %s136
    %p138 = scmp.eq.s32.totalorder %s18, 0
    %p139 = por %p137, %p138
    %s140 = ssub.s32 %s19, %s31
    %p141 = scmp.eq.s32.totalorder %s140, 0
    %s143 = sadd.s32 %s142, 1
    %s144 = scalar_select %p141, %s142, %s143
    %p147 = pneg %p141
    %p148 = scmp.eq.s32.totalorder %s12, 1
    %p149 = por %p147, %p148
    %p150 = scmp.ne.s32.totalorder %s142, %s145
    %p151 = scmp.eq.s32.totalorder %s12, 0
    %p152 = por %p150, %p151
    %p153 = scmp.ne.s32.totalorder %s142, %s145
    %p154 = scmp.eq.s32.totalorder %s17, 1
    %p155 = por %p153, %p154
    %p156 = scmp.ne.s32.totalorder %s145, %s146
    %p157 = scmp.eq.s32.totalorder %s17, 0
    %p158 = por %p156, %p157
    %p159 = scmp.ne.s32.totalorder %s145, %s146
    %p160 = scmp.eq.s32.totalorder %s18, 1
    %p161 = por %p159, %p160
    %p163 = scmp.ne.s32.totalorder %s146, %s162
    %p164 = scmp.eq.s32.totalorder %s18, 0
    %p165 = por %p163, %p164
    %s166 = ssub.s32 %s19, %s31
    %p167 = scmp.eq.s32.totalorder %s166, 0
    %s169 = sadd.s32 %s168, 1
    %s170 = scalar_select %p167, %s168, %s169
    %p173 = pneg %p167
    %p174 = scmp.eq.s32.totalorder %s12, 1
    %p175 = por %p173, %p174
    %p176 = scmp.ne.s32.totalorder %s168, %s171
    %p177 = scmp.eq.s32.totalorder %s12, 0
    %p178 = por %p176, %p177
    %p179 = scmp.ne.s32.totalorder %s168, %s171
    %p180 = scmp.eq.s32.totalorder %s17, 1
    %p181 = por %p179, %p180
    %p182 = scmp.ne.s32.totalorder %s171, %s172
    %p183 = scmp.eq.s32.totalorder %s17, 0
    %p184 = por %p182, %p183
    %p185 = scmp.ne.s32.totalorder %s171, %s172
    %p186 = scmp.eq.s32.totalorder %s18, 1
    %p187 = por %p185, %p186
    %p189 = scmp.ne.s32.totalorder %s172, %s188
    %p190 = scmp.eq.s32.totalorder %s18, 0
    %p191 = por %p189, %p190
    %p192 = scmp.le.s32.totalorder 1, %s12
    %p193 = scmp.lt.s32.totalorder %s12, 3
    %p194 = pnand %p192, %p193
    %p195 = pneg %p194
    // Predicated region
    $region9: #{improved_dice_focal_loss.1} parent=5 // pred_check
      _
    $region10: #{improved_dice_focal_loss.1} parent=5 // pred_check_branch
      %197 = sbr.rel (%p194) target = $region12
    $region11: #{improved_dice_focal_loss.1} parent=5 // pred_region
      %s198 = ssub.s32 %s12, 1
    $region12: #{improved_dice_focal_loss.1} parent=5 // pred_fallthru
      _
    %p199 = scmp.lt.s32.totalorder %s12, 2
    // Predicated region
    $region13: #{improved_dice_focal_loss.1} parent=5 // pred_check
      %p200 = pneg %p199
    $region14: #{improved_dice_focal_loss.1} parent=5 // pred_check_branch
      %202 = sbr.rel (%p200) target = $region16
    $region15: #{improved_dice_focal_loss.1} parent=5 // pred_region
      // Predicated region
      $region17: #{improved_dice_focal_loss.1} parent=15 // pred_check
        %p203 = pneg %p46
      $region18: #{improved_dice_focal_loss.1} parent=15 // pred_check_branch
        %205 = sbr.rel (%p203) target = $region20
      $region19: #{improved_dice_focal_loss.1} parent=15 // pred_region
        %p206 = scmp.lt.s32.totalorder %s19, 1
        %s207 = scalar_select %p206, %s19, 1
        %p208 = scmp.lt.s32.totalorder %s20, 0
        %s209 = scalar_select %p208, %s20, 0
        %s210 = smul.addr %s207, 3
        %s211 = sadd.s32 %s209, %s210
        %s212 = smul.addr %s211, 2
        %s213 = scalar_lea.vmem %s0, %s212
      $region20: #{improved_dice_focal_loss.1} parent=15 // pred_fallthru
        _
      // Predicated region
      $region21: #{improved_dice_focal_loss.1} parent=15 // pred_check
        %p214 = pneg %p74
      $region22: #{improved_dice_focal_loss.1} parent=15 // pred_check_branch
        %216 = sbr.rel (%p214) target = $region24
      $region23: #{improved_dice_focal_loss.1} parent=15 // pred_region
        %p217 = scmp.lt.s32.totalorder %s19, 1
        %s218 = scalar_select %p217, %s19, 1
        %p219 = scmp.lt.s32.totalorder %s20, 0
        %s220 = scalar_select %p219, %s20, 0
        %s221 = sadd.s32 %s220, %s218
        %s222 = smul.addr %s221, 2
        %s223 = scalar_lea.vmem %s1, %s222
      $region24: #{improved_dice_focal_loss.1} parent=15 // pred_fallthru
        _
    $region16: #{improved_dice_focal_loss.1} parent=5 // pred_fallthru
      _
    %p224 = scmp.le.s32.totalorder 1, %s12
    %p225 = scmp.lt.s32.totalorder %s12, 3
    %p226 = pnand %p224, %p225
    %p227 = pneg %p226
    // Predicated region
    $region25: #{improved_dice_focal_loss.1} parent=5 // pred_check
      _
    $region26: #{improved_dice_focal_loss.1} parent=5 // pred_check_branch
      %229 = sbr.rel (%p226) target = $region28
    $region27: #{improved_dice_focal_loss.1} parent=5 // pred_region
      %s230 = ssub.s32 %s12, 1
      %p231 = scmp.lt.s32.totalorder %s21, 1
      %s232 = scalar_select %p231, %s21, 1
      %p233 = scmp.lt.s32.totalorder %s22, 0
      %s234 = scalar_select %p233, %s22, 0
      %s235 = smul.addr %s232, 3
      %s236 = sadd.s32 %s234, %s235
      %s237 = smul.addr %s236, 2
      %s238 = scalar_lea.vmem %s0, %s237
      %p239 = pneg %p52
      %p240 = pneg %p49
      %p241 = scmp.lt.s32.totalorder %s21, 1
      %s242 = scalar_select %p241, %s21, 1
      %p243 = scmp.lt.s32.totalorder %s22, 0
      %s244 = scalar_select %p243, %s22, 0
      %s245 = sadd.s32 %s244, %s242
      %s246 = smul.addr %s245, 2
      %s247 = scalar_lea.vmem %s1, %s246
      %p248 = pneg %p80
      %p249 = pneg %p77
      %p250 = pneg %p106
      %p251 = pneg %p103
      %p252 = scmp.lt.s32.totalorder %s21, 1
      %s253 = scalar_select %p252, %s21, 1
      %s254 = smul.addr %s253, 3
      %s255 = smul.addr %s254, 2
      %s256 = scalar_lea.vmem %s2, %s255
      %p257 = pneg %p132
      %p258 = pneg %p129
      %p259 = scmp.lt.s32.totalorder %s21, 1
      %s260 = scalar_select %p259, %s21, 1
      %s261 = smul.addr %s260, 3
      %s262 = smul.addr %s261, 2
      %s263 = scalar_lea.vmem %s3, %s262
      %p264 = pneg %p158
      %p265 = pneg %p155
      %p266 = scmp.lt.s32.totalorder %s21, 1
      %s267 = scalar_select %p266, %s21, 1
      %s268 = smul.addr %s267, 3
      %s269 = smul.addr %s268, 2
      %s270 = scalar_lea.vmem %s4, %s269
      %p271 = pneg %p184
      %p272 = pneg %p181
      %p273 = scmp.lt.s32.totalorder %s21, 1
      %s274 = scalar_select %p273, %s21, 1
      %s275 = smul.addr %s274, 3
      %s276 = smul.addr %s275, 2
      %s277 = scalar_lea.vmem %s5, %s276
      %p278 = scmp.lt.s32.totalorder %s21, 1
      %s279 = scalar_select %p278, %s21, 1
      %p280 = scmp.lt.s32.totalorder %s22, 0
      %s281 = scalar_select %p280, %s22, 0
      %s282 = smul.addr %s279, 3
      %s283 = sadd.s32 %s281, %s282
      %s284 = smul.addr %s283, 2
      %s285 = scalar_lea.vmem %s0, %s284
      %p286 = scmp.lt.s32.totalorder %s21, 1
      %s287 = scalar_select %p286, %s21, 1
      %p288 = scmp.lt.s32.totalorder %s22, 0
      %s289 = scalar_select %p288, %s22, 0
      %s290 = sadd.s32 %s289, %s287
      %s291 = smul.addr %s290, 2
      %s292 = scalar_lea.vmem %s1, %s291
      %p293 = scmp.lt.s32.totalorder %s21, 1
      %s294 = scalar_select %p293, %s21, 1
      %s295 = smul.addr %s294, 3
      %s296 = smul.addr %s295, 2
      %s297 = scalar_lea.vmem %s2, %s296
      %p298 = scmp.lt.s32.totalorder %s21, 1
      %s299 = scalar_select %p298, %s21, 1
      %s300 = smul.addr %s299, 3
      %s301 = smul.addr %s300, 2
      %s302 = scalar_lea.vmem %s3, %s301
      %p303 = scmp.lt.s32.totalorder %s21, 1
      %s304 = scalar_select %p303, %s21, 1
      %s305 = smul.addr %s304, 3
      %s306 = smul.addr %s305, 2
      %s307 = scalar_lea.vmem %s4, %s306
      %p308 = scmp.lt.s32.totalorder %s21, 1
      %s309 = scalar_select %p308, %s21, 1
      %s310 = smul.addr %s309, 3
      %s311 = smul.addr %s310, 2
      %s312 = scalar_lea.vmem %s5, %s311
      %p313 = scmp.eq.s32.totalorder %s22, 0
      // Predicated region
      $region29: #{improved_dice_focal_loss.1} parent=27 // pred_check
        %p314 = pneg %p313
      $region30: #{improved_dice_focal_loss.1} parent=27 // pred_check_branch
        %316 = sbr.rel (%p314) target = $region32
      $region31: #{improved_dice_focal_loss.1} parent=27 // pred_region
        %317 = vst [vmem:[%s297] sm:$0x3] 0.0
        %318 = vst [vmem:[%s297 + $0x2] sm:$0x3] 0.0
        %319 = vst [vmem:[%s297 + $0x4] sm:$0x3] 0.0
        %320 = vst [vmem:[%s302] sm:$0x3] 0.0
        %321 = vst [vmem:[%s302 + $0x2] sm:$0x3] 0.0
        %322 = vst [vmem:[%s302 + $0x4] sm:$0x3] 0.0
        %323 = vst [vmem:[%s307] sm:$0x3] 0.0
        %324 = vst [vmem:[%s307 + $0x2] sm:$0x3] 0.0
        %325 = vst [vmem:[%s307 + $0x4] sm:$0x3] 0.0
        %326 = vst [vmem:[%s312] sm:$0x3] 0.0
        %327 = vst [vmem:[%s312 + $0x2] sm:$0x3] 0.0
        %328 = vst [vmem:[%s312 + $0x4] sm:$0x3] 0.0
      $region32: #{improved_dice_focal_loss.1} parent=27 // pred_fallthru
        _
      %v329 = vld [vmem:[%s292] sm:$0x3]
      %v330 = vld [vmem:[%s285] sm:$0x3]
      %s331 = scalar_lea.vmem %s285, 2
      %v332 = vld [vmem:[%s331] sm:$0x3]
      %s333 = scalar_lea.vmem %s285, 4
      %v334 = vld [vmem:[%s333] sm:$0x3]
      %v335 = vmax.f32 %v330, %v332
      %v336 = vmax.f32 %v335, %v334
      %v337 = vsub.f32 %v330, %v336
      %v338 = vmul.f32 %v337, 1.442695
      %v339 = vpow.pop %v338
      %v340 = vsub.f32 %v332, %v336
      %v341 = vmul.f32 %v340, 1.442695
      %v342 = vpow.pop %v341
      %v343 = vsub.f32 %v334, %v336
      %v344 = vmul.f32 %v343, 1.442695
      %v345 = vpow.pop %v344
      %v346 = vadd.f32 %v339, %v342
      %v347 = vadd.f32 %v346, %v345
      %v348 = vrcp.pop %v347
      %v349 = vmul.f32 %v347, %v348
      %v350 = vsub.f32 1.0, %v349
      %v351 = vmul.f32 %v348, %v350
      %v352 = vadd.f32 %v348, %v351
      %vm353 = vweird.f32 %v347
      %vm354 = vweird.f32 %v348
      %vm355 = vmor %vm353, %vm354
      %v356 = vsel %vm355, %v348, %v352
      %v357 = vand.u32 2147483647, %v347
      %vm358 = vcmp.eq.f32.partialorder %v357, 8.507059e+37
      %v359 = vand.u32 %v347, 2147483648
      %v360 = vor.u32 1.1754944e-38, %v359
      %v361 = vsel %vm358, %v360, %v356
      %v362 = vlog2.pop %v347
      %v363 = vmul.f32 %v362, 0.6931472
      %vm364 = vcmp.eq.s32.totalorder %v329, 0
      %v365 = vsel %vm364, 1.0, 0.0
      %vm366 = vcmp.eq.s32.totalorder %v329, 1
      %v367 = vsel %vm366, 1.0, 0.0
      %vm368 = vcmp.eq.s32.totalorder %v329, 2
      %v369 = vsel %vm368, 1.0, 0.0
      %v370 = vmul.f32 %v365, %v330
      %v371 = vmul.f32 %v365, %v339
      %v372 = vmul.f32 %v367, %v332
      %v373 = vadd.f32 %v370, %v372
      %v374 = vmul.f32 %v367, %v342
      %v375 = vadd.f32 %v371, %v374
      %v376 = vmul.f32 %v369, %v334
      %v377 = vadd.f32 %v373, %v376
      %v378 = vmul.f32 %v369, %v345
      %v379 = vadd.f32 %v375, %v378
      %v380 = vadd.f32 %v363, %v336
      %v381 = vsub.f32 %v380, %v377
      %v382 = vmul.f32 %v379, %v361
      %v383 = vsub.f32 1.0, %v382
      %v384 = vmul.f32 %v383, %v383
      %v385 = vmul.f32 %v383, %v384
      %v386 = vmul.f32 %v385, %v381
      %v387 = vmul.f32 %v339, %v361
      %v388 = vld [vmem:[%s297] sm:$0x3]
      %v389 = vmul.f32 %v386, %v365
      %v390 = vadd.f32 %v388, %v389
      %391 = vst [vmem:[%s297] sm:$0x3] %v390
      %v392 = vld [vmem:[%s302] sm:$0x3]
      %v393 = vmul.f32 %v382, %v365
      %v394 = vadd.f32 %v392, %v393
      %395 = vst [vmem:[%s302] sm:$0x3] %v394
      %v396 = vld [vmem:[%s307] sm:$0x3]
      %v397 = vadd.f32 %v396, %v387
      %398 = vst [vmem:[%s307] sm:$0x3] %v397
      %v399 = vld [vmem:[%s312] sm:$0x3]
      %v400 = vadd.f32 %v399, %v365
      %401 = vst [vmem:[%s312] sm:$0x3] %v400
      %v402 = vmul.f32 %v342, %v361
      %s403 = scalar_lea.vmem %s297, 2
      %v404 = vld [vmem:[%s403] sm:$0x3]
      %v405 = vmul.f32 %v386, %v367
      %v406 = vadd.f32 %v404, %v405
      %407 = vst [vmem:[%s403] sm:$0x3] %v406
      %s408 = scalar_lea.vmem %s302, 2
      %v409 = vld [vmem:[%s408] sm:$0x3]
      %v410 = vmul.f32 %v382, %v367
      %v411 = vadd.f32 %v409, %v410
      %412 = vst [vmem:[%s408] sm:$0x3] %v411
      %s413 = scalar_lea.vmem %s307, 2
      %v414 = vld [vmem:[%s413] sm:$0x3]
      %v415 = vadd.f32 %v414, %v402
      %416 = vst [vmem:[%s413] sm:$0x3] %v415
      %s417 = scalar_lea.vmem %s312, 2
      %v418 = vld [vmem:[%s417] sm:$0x3]
      %v419 = vadd.f32 %v418, %v367
      %420 = vst [vmem:[%s417] sm:$0x3] %v419
      %v421 = vmul.f32 %v345, %v361
      %s422 = scalar_lea.vmem %s297, 4
      %v423 = vld [vmem:[%s422] sm:$0x3]
      %v424 = vmul.f32 %v386, %v369
      %v425 = vadd.f32 %v423, %v424
      %426 = vst [vmem:[%s422] sm:$0x3] %v425
      %s427 = scalar_lea.vmem %s302, 4
      %v428 = vld [vmem:[%s427] sm:$0x3]
      %v429 = vmul.f32 %v382, %v369
      %v430 = vadd.f32 %v428, %v429
      %431 = vst [vmem:[%s427] sm:$0x3] %v430
      %s432 = scalar_lea.vmem %s307, 4
      %v433 = vld [vmem:[%s432] sm:$0x3]
      %v434 = vadd.f32 %v433, %v421
      %435 = vst [vmem:[%s432] sm:$0x3] %v434
      %s436 = scalar_lea.vmem %s312, 4
      %v437 = vld [vmem:[%s436] sm:$0x3]
      %v438 = vadd.f32 %v437, %v369
      %439 = vst [vmem:[%s436] sm:$0x3] %v438
      %p440 = scmp.lt.s32.totalorder %s21, 1
      %s441 = scalar_select %p440, %s21, 1
      %s442 = smul.addr %s441, 3
      %s443 = smul.addr %s442, 2
      %s444 = scalar_lea.vmem %s2, %s443
      %p445 = scmp.lt.s32.totalorder %s21, 1
      %s446 = scalar_select %p445, %s21, 1
      %s447 = smul.addr %s446, 3
      %s448 = smul.addr %s447, 2
      %s449 = scalar_lea.vmem %s3, %s448
      %p450 = scmp.lt.s32.totalorder %s21, 1
      %s451 = scalar_select %p450, %s21, 1
      %s452 = smul.addr %s451, 3
      %s453 = smul.addr %s452, 2
      %s454 = scalar_lea.vmem %s4, %s453
      %p455 = scmp.lt.s32.totalorder %s21, 1
      %s456 = scalar_select %p455, %s21, 1
      %s457 = smul.addr %s456, 3
      %s458 = smul.addr %s457, 2
      %s459 = scalar_lea.vmem %s5, %s458
      // Predicated region
      $region33: #{improved_dice_focal_loss.1} parent=27 // pred_check
        %p460 = pneg %p103
      $region34: #{improved_dice_focal_loss.1} parent=27 // pred_check_branch
        %462 = sbr.rel (%p460) target = $region36
      $region35: #{improved_dice_focal_loss.1} parent=27 // pred_region
        _
      $region36: #{improved_dice_focal_loss.1} parent=27 // pred_fallthru
        _
      // Predicated region
      $region37: #{improved_dice_focal_loss.1} parent=27 // pred_check
        %p463 = pneg %p129
      $region38: #{improved_dice_focal_loss.1} parent=27 // pred_check_branch
        %465 = sbr.rel (%p463) target = $region40
      $region39: #{improved_dice_focal_loss.1} parent=27 // pred_region
        _
      $region40: #{improved_dice_focal_loss.1} parent=27 // pred_fallthru
        _
      // Predicated region
      $region41: #{improved_dice_focal_loss.1} parent=27 // pred_check
        %p466 = pneg %p155
      $region42: #{improved_dice_focal_loss.1} parent=27 // pred_check_branch
        %468 = sbr.rel (%p466) target = $region44
      $region43: #{improved_dice_focal_loss.1} parent=27 // pred_region
        _
      $region44: #{improved_dice_focal_loss.1} parent=27 // pred_fallthru
        _
      // Predicated region
      $region45: #{improved_dice_focal_loss.1} parent=27 // pred_check
        %p469 = pneg %p181
      $region46: #{improved_dice_focal_loss.1} parent=27 // pred_check_branch
        %471 = sbr.rel (%p469) target = $region48
      $region47: #{improved_dice_focal_loss.1} parent=27 // pred_region
        _
      $region48: #{improved_dice_focal_loss.1} parent=27 // pred_fallthru
        _
    $region28: #{improved_dice_focal_loss.1} parent=5 // pred_fallthru
      _
    %p472 = scmp.le.s32.totalorder 2, %s12
    // Predicated region
    $region49: #{improved_dice_focal_loss.1} parent=5 // pred_check
      %p473 = pneg %p472
    $region50: #{improved_dice_focal_loss.1} parent=5 // pred_check_branch
      %475 = sbr.rel (%p473) target = $region52
    $region51: #{improved_dice_focal_loss.1} parent=5 // pred_region
      %s476 = ssub.s32 %s12, 2
      // Predicated region
      $region53: #{improved_dice_focal_loss.1} parent=51 // pred_check
        %p477 = pneg %p109
      $region54: #{improved_dice_focal_loss.1} parent=51 // pred_check_branch
        %479 = sbr.rel (%p477) target = $region56
      $region55: #{improved_dice_focal_loss.1} parent=51 // pred_region
        %p480 = scmp.lt.s32.totalorder %s23, 1
        %s481 = scalar_select %p480, %s23, 1
        %s482 = smul.addr %s481, 3
        %s483 = smul.addr %s482, 2
        %s484 = scalar_lea.vmem %s2, %s483
      $region56: #{improved_dice_focal_loss.1} parent=51 // pred_fallthru
        _
      // Predicated region
      $region57: #{improved_dice_focal_loss.1} parent=51 // pred_check
        %p485 = pneg %p135
      $region58: #{improved_dice_focal_loss.1} parent=51 // pred_check_branch
        %487 = sbr.rel (%p485) target = $region60
      $region59: #{improved_dice_focal_loss.1} parent=51 // pred_region
        %p488 = scmp.lt.s32.totalorder %s23, 1
        %s489 = scalar_select %p488, %s23, 1
        %s490 = smul.addr %s489, 3
        %s491 = smul.addr %s490, 2
        %s492 = scalar_lea.vmem %s3, %s491
      $region60: #{improved_dice_focal_loss.1} parent=51 // pred_fallthru
        _
      // Predicated region
      $region61: #{improved_dice_focal_loss.1} parent=51 // pred_check
        %p493 = pneg %p161
      $region62: #{improved_dice_focal_loss.1} parent=51 // pred_check_branch
        %495 = sbr.rel (%p493) target = $region64
      $region63: #{improved_dice_focal_loss.1} parent=51 // pred_region
        %p496 = scmp.lt.s32.totalorder %s23, 1
        %s497 = scalar_select %p496, %s23, 1
        %s498 = smul.addr %s497, 3
        %s499 = smul.addr %s498, 2
        %s500 = scalar_lea.vmem %s4, %s499
      $region64: #{improved_dice_focal_loss.1} parent=51 // pred_fallthru
        _
      // Predicated region
      $region65: #{improved_dice_focal_loss.1} parent=51 // pred_check
        %p501 = pneg %p187
      $region66: #{improved_dice_focal_loss.1} parent=51 // pred_check_branch
        %503 = sbr.rel (%p501) target = $region68
      $region67: #{improved_dice_focal_loss.1} parent=51 // pred_region
        %p504 = scmp.lt.s32.totalorder %s23, 1
        %s505 = scalar_select %p504, %s23, 1
        %s506 = smul.addr %s505, 3
        %s507 = smul.addr %s506, 2
        %s508 = scalar_lea.vmem %s5, %s507
      $region68: #{improved_dice_focal_loss.1} parent=51 // pred_fallthru
        _
    $region52: #{improved_dice_focal_loss.1} parent=5 // pred_fallthru
      _
  $region6: #{improved_dice_focal_loss.1} parent=0 // loop_footer
    %s16 = sadd.s32 1, %s12
  $region7: #{improved_dice_focal_loss.1} parent=0 // loop_footer_branch
    %11 = sbr.rel target = $region3
  $region8: #{improved_dice_focal_loss.1} parent=0 // loop_exit
    _

</llo_original>
